<compile_context>
chip_gen: v5e
topology: v5e:2x2
jax: 0.10.0
libtpu: 0.0.40
codegen_flags: <defaults>
</compile_context>

<pallas_src>
import jax
import jax.numpy as jnp
from jax.experimental import pallas as pl
from jax.experimental.pallas import tpu as pltpu

LANES = 128


def sensornet_kernel(x_ref, w1_ref, b1_ref, w2_ref, b2_ref, o_ref):
    # x_ref:  (TR, 128)     f32 VMEM  lane-dense block of sensor readings
    # w1_ref: (H,)          f32 SMEM  fc1 weight (input feature dim is 1)
    # b1_ref: (H,)          f32 SMEM  fc1 bias
    # w2_ref: (H*C,)        f32 SMEM  fc2 weight, row-major [h, c]
    # b2_ref: (C,)          f32 SMEM  fc2 bias
    # o_ref:  (C, TR, 128)  f32 VMEM  per-class probability planes
    hidden = w1_ref.shape[0]
    num_classes = o_ref.shape[0]

    x = x_ref[...]  # (TR, 128) f32

    # fc1 + ReLU + fc2, fully unrolled on the VPU.  Only C+2 large live
    # intermediates at any time (x, the C running accumulators, h_j).
    h0 = jnp.maximum(x * w1_ref[0] + b1_ref[0], 0.0)
    logits = [h0 * w2_ref[c] for c in range(num_classes)]
    for j in range(1, hidden):
        hj = jnp.maximum(x * w1_ref[j] + b1_ref[j], 0.0)
        for c in range(num_classes):
            logits[c] = logits[c] + hj * w2_ref[j * num_classes + c]
    for c in range(num_classes):
        logits[c] = logits[c] + b2_ref[c]

    # Softmax over classes, elementwise across the class planes (no cross-lane
    # reductions).  exp() uses the EUP slot, which is otherwise idle here.
    m = logits[0]
    for c in range(1, num_classes):
        m = jnp.maximum(m, logits[c])
    exps = [jnp.exp(l - m) for l in logits]
    denom = exps[0]
    for c in range(1, num_classes):
        denom = denom + exps[c]
    # Exact reciprocal keeps the 1e-5 reference check robust; this kernel is
    # memory-bound so the extra VPU work is hidden under the HBM roofline.
    inv = pl.reciprocal(denom, approx=False)
    for c in range(num_classes):
        o_ref[c, :, :] = exps[c] * inv


def sensornet_forward(x, w1, b1, w2, b2, *, tile_rows=1024):
    """SensorNet forward: x.view(-1,1) -> fc1 -> ReLU -> fc2 -> softmax(dim=1).

    x: any shape (flattened like the PyTorch forward).
    w1, b1: (H,)   fc1 weight/bias (input dim is 1).
    w2:     (H, C) fc2 weight stored [in, out].
    b2:     (C,)   fc2 bias.
    Returns (N, C) float32 probabilities.
    """
    xf = jnp.ravel(x).astype(jnp.float32)
    n = xf.shape[0]
    num_classes = w2.shape[1]

    # Lane-dense layout: pad only up to the 128-lane boundary (<=127 extra
    # elements), never a full padded-tile copy of the whole array.
    rows = pl.cdiv(n, LANES)
    n_pad = rows * LANES
    if n_pad != n:
        xf = jnp.pad(xf, (0, n_pad - n))
    x2d = xf.reshape(rows, LANES)

    # Large row tiles amortize the per-grid-step overhead; clamp so the
    # double-buffered (input + C output planes) blocks stay within ~8 MiB of
    # VMEM regardless of num_classes.  tr is either a multiple of 8 or equals
    # the full row extent (both satisfy the (8,128) BlockSpec constraint).
    vmem_budget = 8 * 1024 * 1024
    tr_cap = (vmem_budget // ((1 + num_classes) * LANES * 4 * 2)) // 8 * 8
    tr_target = max(8, min(tile_rows, tr_cap))
    tr = rows if rows <= tr_target else tr_target
    grid = (pl.cdiv(rows, tr),)

    out = pl.pallas_call(
        sensornet_kernel,
        out_shape=jax.ShapeDtypeStruct((num_classes, rows, LANES), jnp.float32),
        grid=grid,
        in_specs=[
            # Lane-dense input tile (auto double-buffered by Pallas).
            pl.BlockSpec((tr, LANES), lambda i: (i, 0)),
            # The 8+8+8*C+C weight/bias scalars live in SMEM and feed the
            # unrolled VPU FMA chain (no padded VMEM tiles for them).
            pl.BlockSpec(memory_space=pltpu.MemorySpace.SMEM),  # w1 (H,)
            pl.BlockSpec(memory_space=pltpu.MemorySpace.SMEM),  # b1 (H,)
            pl.BlockSpec(memory_space=pltpu.MemorySpace.SMEM),  # w2 flat (H*C,)
            pl.BlockSpec(memory_space=pltpu.MemorySpace.SMEM),  # b2 (C,)
        ],
        out_specs=pl.BlockSpec((num_classes, tr, LANES), lambda i: (0, i, 0)),
        compiler_params=pltpu.CompilerParams(
            dimension_semantics=("parallel",)),
    )(
        x2d,
        w1.astype(jnp.float32),
        b1.astype(jnp.float32),
        w2.reshape(-1).astype(jnp.float32),
        b2.astype(jnp.float32),
    )

    # (C, rows, 128) lane-dense planes -> (N, C): wrapper-side layout plumbing
    # handled by XLA (keeps every in-kernel store full-width and unmasked).
    probs = out.transpose(1, 2, 0).reshape(rows * LANES, num_classes)
    return probs[:n]


def init_params(key, num_classes=2, hidden=8):
    """nn.Linear-style init: U(-1/sqrt(fan_in), 1/sqrt(fan_in))."""
    k1, k2, k3, k4 = jax.random.split(key, 4)
    bound1 = 1.0  # fc1 fan_in = 1
    w1 = jax.random.uniform(k1, (hidden,), jnp.float32, -bound1, bound1)
    b1 = jax.random.uniform(k2, (hidden,), jnp.float32, -bound1, bound1)
    bound2 = 1.0 / jnp.sqrt(float(hidden))  # fc2 fan_in = 8
    w2 = jax.random.uniform(k3, (hidden, num_classes), jnp.float32, -bound2, bound2)
    b2 = jax.random.uniform(k4, (num_classes,), jnp.float32, -bound2, bound2)
    return w1, b1, w2, b2


if __name__ == "__main__":
    key = jax.random.PRNGKey(0)
    kx, kp, kx2 = jax.random.split(key, 3)

    w1, b1, w2, b2 = init_params(kp, num_classes=2)

    def reference(xin):
        xf = xin.reshape(-1, 1)
        h = jnp.maximum(xf * w1[None, :] + b1[None, :], 0.0)
        return jax.nn.softmax(h @ w2 + b2[None, :], axis=1)

    # Small input consistent with the module (forward flattens to (-1, 1)).
    x = jax.random.normal(kx, (2, 8), jnp.float32)  # -> 16 sensor readings
    out = jax.block_until_ready(sensornet_forward(x, w1, b1, w2, b2))
    ref = reference(x)
    assert out.shape == (16, 2)
    assert jnp.allclose(out, ref, atol=1e-5), "mismatch vs reference (small)"
    assert jnp.allclose(jnp.sum(out, axis=1), 1.0, atol=1e-5)

    # Extra correctness check exercising the tiled path: multiple grid steps,
    # a partial last row-block, and a ragged (non-128-multiple) tail.
    x_big = jax.random.normal(kx2, (325, 400), jnp.float32)  # 130000 readings
    out_big = jax.block_until_ready(sensornet_forward(x_big, w1, b1, w2, b2))
    ref_big = reference(x_big)
    assert out_big.shape == (130000, 2)
    assert jnp.allclose(out_big, ref_big, atol=1e-5), "mismatch vs reference (tiled)"

    print("KERNEL_OK")
</pallas_src>

<mosaic_0001>
module attributes {stable_mosaic.version = 11 : i64} {
  func.func @sensornet_kernel(%arg0: i32, %arg1: memref<1x128xf32, #tpu.memory_space<vmem>>, %arg2: memref<8xf32, #tpu.memory_space<smem>>, %arg3: memref<8xf32, #tpu.memory_space<smem>>, %arg4: memref<16xf32, #tpu.memory_space<smem>>, %arg5: memref<2xf32, #tpu.memory_space<smem>>, %arg6: memref<2x1x128xf32, #tpu.memory_space<vmem>>) attributes {dimension_semantics = [#tpu.dimension_semantics<parallel>], iteration_bounds = array<i64: 1>, scalar_prefetch = 0 : i64, scratch_operands = 0 : i64, tpu.core_type = #tpu.core_type<tc>, window_params = [{transform_indices = @transform_0, window_bounds = array<i64: 1, 128>}, {transform_indices = @transform_1, window_bounds = array<i64: 8>}, {transform_indices = @transform_2, window_bounds = array<i64: 8>}, {transform_indices = @transform_3, window_bounds = array<i64: 16>}, {transform_indices = @transform_4, window_bounds = array<i64: 2>}, {transform_indices = @transform_5, window_bounds = array<i64: 2, 1, 128>}]} {
    %c0 = arith.constant 0 : index
    %c0_0 = arith.constant 0 : index
    %0 = vector.load %arg1[%c0, %c0_0] : memref<1x128xf32, #tpu.memory_space<vmem>>, vector<1x128xf32>
    %c0_1 = arith.constant 0 : index
    %1 = memref.load %arg2[%c0_1] : memref<8xf32, #tpu.memory_space<smem>>
    %2 = vector.broadcast %1 : f32 to vector<1x128xf32>
    %3 = arith.mulf %0, %2 : vector<1x128xf32>
    %c0_2 = arith.constant 0 : index
    %4 = memref.load %arg3[%c0_2] : memref<8xf32, #tpu.memory_space<smem>>
    %5 = vector.broadcast %4 : f32 to vector<1x128xf32>
    %6 = arith.addf %3, %5 : vector<1x128xf32>
    %cst = arith.constant 0.000000e+00 : f32
    %7 = vector.broadcast %cst : f32 to vector<1x128xf32>
    %8 = arith.maximumf %6, %7 : vector<1x128xf32>
    %c0_3 = arith.constant 0 : index
    %9 = memref.load %arg4[%c0_3] : memref<16xf32, #tpu.memory_space<smem>>
    %10 = vector.broadcast %9 : f32 to vector<1x128xf32>
    %11 = arith.mulf %8, %10 : vector<1x128xf32>
    %c1 = arith.constant 1 : index
    %12 = memref.load %arg4[%c1] : memref<16xf32, #tpu.memory_space<smem>>
    %13 = vector.broadcast %12 : f32 to vector<1x128xf32>
    %14 = arith.mulf %8, %13 : vector<1x128xf32>
    %c1_4 = arith.constant 1 : index
    %15 = memref.load %arg2[%c1_4] : memref<8xf32, #tpu.memory_space<smem>>
    %16 = vector.broadcast %15 : f32 to vector<1x128xf32>
    %17 = arith.mulf %0, %16 : vector<1x128xf32>
    %c1_5 = arith.constant 1 : index
    %18 = memref.load %arg3[%c1_5] : memref<8xf32, #tpu.memory_space<smem>>
    %19 = vector.broadcast %18 : f32 to vector<1x128xf32>
    %20 = arith.addf %17, %19 : vector<1x128xf32>
    %cst_6 = arith.constant 0.000000e+00 : f32
    %21 = vector.broadcast %cst_6 : f32 to vector<1x128xf32>
    %22 = arith.maximumf %20, %21 : vector<1x128xf32>
    %c2 = arith.constant 2 : index
    %23 = memref.load %arg4[%c2] : memref<16xf32, #tpu.memory_space<smem>>
    %24 = vector.broadcast %23 : f32 to vector<1x128xf32>
    %25 = arith.mulf %22, %24 : vector<1x128xf32>
    %26 = arith.addf %11, %25 : vector<1x128xf32>
    %c3 = arith.constant 3 : index
    %27 = memref.load %arg4[%c3] : memref<16xf32, #tpu.memory_space<smem>>
    %28 = vector.broadcast %27 : f32 to vector<1x128xf32>
    %29 = arith.mulf %22, %28 : vector<1x128xf32>
    %30 = arith.addf %14, %29 : vector<1x128xf32>
    %c2_7 = arith.constant 2 : index
    %31 = memref.load %arg2[%c2_7] : memref<8xf32, #tpu.memory_space<smem>>
    %32 = vector.broadcast %31 : f32 to vector<1x128xf32>
    %33 = arith.mulf %0, %32 : vector<1x128xf32>
    %c2_8 = arith.constant 2 : index
    %34 = memref.load %arg3[%c2_8] : memref<8xf32, #tpu.memory_space<smem>>
    %35 = vector.broadcast %34 : f32 to vector<1x128xf32>
    %36 = arith.addf %33, %35 : vector<1x128xf32>
    %cst_9 = arith.constant 0.000000e+00 : f32
    %37 = vector.broadcast %cst_9 : f32 to vector<1x128xf32>
    %38 = arith.maximumf %36, %37 : vector<1x128xf32>
    %c4 = arith.constant 4 : index
    %39 = memref.load %arg4[%c4] : memref<16xf32, #tpu.memory_space<smem>>
    %40 = vector.broadcast %39 : f32 to vector<1x128xf32>
    %41 = arith.mulf %38, %40 : vector<1x128xf32>
    %42 = arith.addf %26, %41 : vector<1x128xf32>
    %c5 = arith.constant 5 : index
    %43 = memref.load %arg4[%c5] : memref<16xf32, #tpu.memory_space<smem>>
    %44 = vector.broadcast %43 : f32 to vector<1x128xf32>
    %45 = arith.mulf %38, %44 : vector<1x128xf32>
    %46 = arith.addf %30, %45 : vector<1x128xf32>
    %c3_10 = arith.constant 3 : index
    %47 = memref.load %arg2[%c3_10] : memref<8xf32, #tpu.memory_space<smem>>
    %48 = vector.broadcast %47 : f32 to vector<1x128xf32>
    %49 = arith.mulf %0, %48 : vector<1x128xf32>
    %c3_11 = arith.constant 3 : index
    %50 = memref.load %arg3[%c3_11] : memref<8xf32, #tpu.memory_space<smem>>
    %51 = vector.broadcast %50 : f32 to vector<1x128xf32>
    %52 = arith.addf %49, %51 : vector<1x128xf32>
    %cst_12 = arith.constant 0.000000e+00 : f32
    %53 = vector.broadcast %cst_12 : f32 to vector<1x128xf32>
    %54 = arith.maximumf %52, %53 : vector<1x128xf32>
    %c6 = arith.constant 6 : index
    %55 = memref.load %arg4[%c6] : memref<16xf32, #tpu.memory_space<smem>>
    %56 = vector.broadcast %55 : f32 to vector<1x128xf32>
    %57 = arith.mulf %54, %56 : vector<1x128xf32>
    %58 = arith.addf %42, %57 : vector<1x128xf32>
    %c7 = arith.constant 7 : index
    %59 = memref.load %arg4[%c7] : memref<16xf32, #tpu.memory_space<smem>>
    %60 = vector.broadcast %59 : f32 to vector<1x128xf32>
    %61 = arith.mulf %54, %60 : vector<1x128xf32>
    %62 = arith.addf %46, %61 : vector<1x128xf32>
    %c4_13 = arith.constant 4 : index
    %63 = memref.load %arg2[%c4_13] : memref<8xf32, #tpu.memory_space<smem>>
    %64 = vector.broadcast %63 : f32 to vector<1x128xf32>
    %65 = arith.mulf %0, %64 : vector<1x128xf32>
    %c4_14 = arith.constant 4 : index
    %66 = memref.load %arg3[%c4_14] : memref<8xf32, #tpu.memory_space<smem>>
    %67 = vector.broadcast %66 : f32 to vector<1x128xf32>
    %68 = arith.addf %65, %67 : vector<1x128xf32>
    %cst_15 = arith.constant 0.000000e+00 : f32
    %69 = vector.broadcast %cst_15 : f32 to vector<1x128xf32>
    %70 = arith.maximumf %68, %69 : vector<1x128xf32>
    %c8 = arith.constant 8 : index
    %71 = memref.load %arg4[%c8] : memref<16xf32, #tpu.memory_space<smem>>
    %72 = vector.broadcast %71 : f32 to vector<1x128xf32>
    %73 = arith.mulf %70, %72 : vector<1x128xf32>
    %74 = arith.addf %58, %73 : vector<1x128xf32>
    %c9 = arith.constant 9 : index
    %75 = memref.load %arg4[%c9] : memref<16xf32, #tpu.memory_space<smem>>
    %76 = vector.broadcast %75 : f32 to vector<1x128xf32>
    %77 = arith.mulf %70, %76 : vector<1x128xf32>
    %78 = arith.addf %62, %77 : vector<1x128xf32>
    %c5_16 = arith.constant 5 : index
    %79 = memref.load %arg2[%c5_16] : memref<8xf32, #tpu.memory_space<smem>>
    %80 = vector.broadcast %79 : f32 to vector<1x128xf32>
    %81 = arith.mulf %0, %80 : vector<1x128xf32>
    %c5_17 = arith.constant 5 : index
    %82 = memref.load %arg3[%c5_17] : memref<8xf32, #tpu.memory_space<smem>>
    %83 = vector.broadcast %82 : f32 to vector<1x128xf32>
    %84 = arith.addf %81, %83 : vector<1x128xf32>
    %cst_18 = arith.constant 0.000000e+00 : f32
    %85 = vector.broadcast %cst_18 : f32 to vector<1x128xf32>
    %86 = arith.maximumf %84, %85 : vector<1x128xf32>
    %c10 = arith.constant 10 : index
    %87 = memref.load %arg4[%c10] : memref<16xf32, #tpu.memory_space<smem>>
    %88 = vector.broadcast %87 : f32 to vector<1x128xf32>
    %89 = arith.mulf %86, %88 : vector<1x128xf32>
    %90 = arith.addf %74, %89 : vector<1x128xf32>
    %c11 = arith.constant 11 : index
    %91 = memref.load %arg4[%c11] : memref<16xf32, #tpu.memory_space<smem>>
    %92 = vector.broadcast %91 : f32 to vector<1x128xf32>
    %93 = arith.mulf %86, %92 : vector<1x128xf32>
    %94 = arith.addf %78, %93 : vector<1x128xf32>
    %c6_19 = arith.constant 6 : index
    %95 = memref.load %arg2[%c6_19] : memref<8xf32, #tpu.memory_space<smem>>
    %96 = vector.broadcast %95 : f32 to vector<1x128xf32>
    %97 = arith.mulf %0, %96 : vector<1x128xf32>
    %c6_20 = arith.constant 6 : index
    %98 = memref.load %arg3[%c6_20] : memref<8xf32, #tpu.memory_space<smem>>
    %99 = vector.broadcast %98 : f32 to vector<1x128xf32>
    %100 = arith.addf %97, %99 : vector<1x128xf32>
    %cst_21 = arith.constant 0.000000e+00 : f32
    %101 = vector.broadcast %cst_21 : f32 to vector<1x128xf32>
    %102 = arith.maximumf %100, %101 : vector<1x128xf32>
    %c12 = arith.constant 12 : index
    %103 = memref.load %arg4[%c12] : memref<16xf32, #tpu.memory_space<smem>>
    %104 = vector.broadcast %103 : f32 to vector<1x128xf32>
    %105 = arith.mulf %102, %104 : vector<1x128xf32>
    %106 = arith.addf %90, %105 : vector<1x128xf32>
    %c13 = arith.constant 13 : index
    %107 = memref.load %arg4[%c13] : memref<16xf32, #tpu.memory_space<smem>>
    %108 = vector.broadcast %107 : f32 to vector<1x128xf32>
    %109 = arith.mulf %102, %108 : vector<1x128xf32>
    %110 = arith.addf %94, %109 : vector<1x128xf32>
    %c7_22 = arith.constant 7 : index
    %111 = memref.load %arg2[%c7_22] : memref<8xf32, #tpu.memory_space<smem>>
    %112 = vector.broadcast %111 : f32 to vector<1x128xf32>
    %113 = arith.mulf %0, %112 : vector<1x128xf32>
    %c7_23 = arith.constant 7 : index
    %114 = memref.load %arg3[%c7_23] : memref<8xf32, #tpu.memory_space<smem>>
    %115 = vector.broadcast %114 : f32 to vector<1x128xf32>
    %116 = arith.addf %113, %115 : vector<1x128xf32>
    %cst_24 = arith.constant 0.000000e+00 : f32
    %117 = vector.broadcast %cst_24 : f32 to vector<1x128xf32>
    %118 = arith.maximumf %116, %117 : vector<1x128xf32>
    %c14 = arith.constant 14 : index
    %119 = memref.load %arg4[%c14] : memref<16xf32, #tpu.memory_space<smem>>
    %120 = vector.broadcast %119 : f32 to vector<1x128xf32>
    %121 = arith.mulf %118, %120 : vector<1x128xf32>
    %122 = arith.addf %106, %121 : vector<1x128xf32>
    %c15 = arith.constant 15 : index
    %123 = memref.load %arg4[%c15] : memref<16xf32, #tpu.memory_space<smem>>
    %124 = vector.broadcast %123 : f32 to vector<1x128xf32>
    %125 = arith.mulf %118, %124 : vector<1x128xf32>
    %126 = arith.addf %110, %125 : vector<1x128xf32>
    %c0_25 = arith.constant 0 : index
    %127 = memref.load %arg5[%c0_25] : memref<2xf32, #tpu.memory_space<smem>>
    %128 = vector.broadcast %127 : f32 to vector<1x128xf32>
    %129 = arith.addf %122, %128 : vector<1x128xf32>
    %c1_26 = arith.constant 1 : index
    %130 = memref.load %arg5[%c1_26] : memref<2xf32, #tpu.memory_space<smem>>
    %131 = vector.broadcast %130 : f32 to vector<1x128xf32>
    %132 = arith.addf %126, %131 : vector<1x128xf32>
    %133 = arith.maximumf %129, %132 : vector<1x128xf32>
    %134 = arith.subf %129, %133 : vector<1x128xf32>
    %135 = math.exp %134 : vector<1x128xf32>
    %136 = arith.subf %132, %133 : vector<1x128xf32>
    %137 = math.exp %136 : vector<1x128xf32>
    %138 = arith.addf %135, %137 : vector<1x128xf32>
    %139 = tpu.reciprocal %138 : vector<1x128xf32> -> vector<1x128xf32>
    %140 = arith.mulf %135, %139 : vector<1x128xf32>
    %c0_27 = arith.constant 0 : index
    %c0_28 = arith.constant 0 : index
    %c0_29 = arith.constant 0 : index
    %141 = vector.load %arg6[%c0_27, %c0_28, %c0_29] : memref<2x1x128xf32, #tpu.memory_space<vmem>>, vector<1x1x128xf32>
    %142 = vector.shape_cast %141 : vector<1x1x128xf32> to vector<1x128xf32>
    %143 = vector.shape_cast %140 : vector<1x128xf32> to vector<1x1x128xf32>
    tpu.vector_store %arg6[%c0_27, %c0_28, %c0_29], %143 {strides = array<i32>} : memref<2x1x128xf32, #tpu.memory_space<vmem>>, vector<1x1x128xf32>,
    %144 = arith.mulf %137, %139 : vector<1x128xf32>
    %c1_30 = arith.constant 1 : index
    %c0_31 = arith.constant 0 : index
    %c0_32 = arith.constant 0 : index
    %145 = vector.load %arg6[%c1_30, %c0_31, %c0_32] : memref<2x1x128xf32, #tpu.memory_space<vmem>>, vector<1x1x128xf32>
    %146 = vector.shape_cast %145 : vector<1x1x128xf32> to vector<1x128xf32>
    %147 = vector.shape_cast %144 : vector<1x128xf32> to vector<1x1x128xf32>
    tpu.vector_store %arg6[%c1_30, %c0_31, %c0_32], %147 {strides = array<i32>} : memref<2x1x128xf32, #tpu.memory_space<vmem>>, vector<1x1x128xf32>,
    return
  }
  func.func @transform_0(%arg0: i32) -> (i32, i32) {
    %c0_i32 = arith.constant 0 : i32
    %c0_i32_0 = arith.constant 0 : i32
    return %arg0, %c0_i32 : i32, i32
  }
  func.func @transform_1(%arg0: i32) -> i32 {
    %c0_i32 = arith.constant 0 : i32
    %c0_i32_0 = arith.constant 0 : i32
    return %c0_i32 : i32
  }
  func.func @transform_2(%arg0: i32) -> i32 {
    %c0_i32 = arith.constant 0 : i32
    %c0_i32_0 = arith.constant 0 : i32
    return %c0_i32 : i32
  }
  func.func @transform_3(%arg0: i32) -> i32 {
    %c0_i32 = arith.constant 0 : i32
    %c0_i32_0 = arith.constant 0 : i32
    return %c0_i32 : i32
  }
  func.func @transform_4(%arg0: i32) -> i32 {
    %c0_i32 = arith.constant 0 : i32
    %c0_i32_0 = arith.constant 0 : i32
    return %c0_i32 : i32
  }
  func.func @transform_5(%arg0: i32) -> (i32, i32, i32) {
    %c0_i32 = arith.constant 0 : i32
    %c0_i32_0 = arith.constant 0 : i32
    %c0_i32_1 = arith.constant 0 : i32
    return %c0_i32, %arg0, %c0_i32_0 : i32, i32, i32
  }
}

</mosaic_0001>

<llo_original>
// kernel: tpu_custom_call.1
$region0: #{tpu_custom_call.1}
  #allocation0 [shape = 'u32[]', space=smem, size = 0x4, offset = 0x4, fixed_abs, tag = 'smem constant byte address 0x4 - core index']
  #allocation1 [shape = 'u32[72,128]{1,0:T(1,128)}', space=vmem, size = 0x9000, scoped, tag = 'internal scratch']
  %s0 = inlined_call_operand.hbm [shape: f32[1,128], index: 0, kind: input, shape index: {}]
  %s1 = inlined_call_operand.hbm [shape: f32[8], index: 1, kind: input, shape index: {}]
  %s2 = inlined_call_operand.vmem [shape: f32[8], index: 2, kind: input, shape index: {}]
  %s3 = inlined_call_operand.vmem [shape: f32[16], index: 3, kind: input, shape index: {}]
  %s4 = inlined_call_operand.vmem [shape: f32[2], index: 4, kind: input, shape index: {}]
  %s5 = inlined_call_operand.hbm [shape: f32[2,1,128], index: 5, kind: output, shape index: {}]
  %s6 = sld [smem:[#allocation0]]
  $region50: #{tpu_custom_call.1} parent=0
    _
  %s8 = ssub.s32 1, %s6
  %s9 = scalar_select 0, %s8, %s6
  $region1: #{tpu_custom_call.1} parent=0
    #allocation2 [shape = 'u8[512]{0}', space=vmem, size = 0x400, scoped, tag = 'input window, operand 0, single buffered']
    #allocation3 [shape = 's32[1]{0}', space=sflag, size = 0x4, scoped, tag = 'scoped memory for tpu_custom_call.1']
    #allocation4 [shape = 's32[1]{0}', space=sflag, size = 0x4, scoped, tag = 'scoped memory for tpu_custom_call.1']
    #allocation5 [shape = 's32[1]{0}', space=sflag, size = 0x4, scoped, tag = 'scoped memory for tpu_custom_call.1']
    #allocation6 [shape = 's32[1]{0}', space=sflag, size = 0x4, scoped, tag = 'scoped memory for tpu_custom_call.1']
    #allocation7 [shape = 'u8[512]{0}', space=smem, size = 0x200, scoped, tag = 'input window, operand 1, single buffered']
    #allocation8 [shape = 'u8[512]{0}', space=smem, size = 0x200, scoped, tag = 'input window, operand 2, single buffered']
    #allocation9 [shape = 'u8[512]{0}', space=smem, size = 0x200, scoped, tag = 'input window, operand 3, single buffered']
    #allocation10 [shape = 's32[1]{0}', space=sflag, size = 0x4, scoped, tag = 'scoped memory for tpu_custom_call.1']
    #allocation11 [shape = 'u8[512]{0}', space=smem, size = 0x200, scoped, tag = 'input window, operand 4, single buffered']
    #allocation12 [shape = 'u8[1024]{0}', space=vmem, size = 0x400, scoped, tag = 'output window, operand 0, single buffered']
    %10 = vsyncpa [#allocation3], 0
    %11 = vsyncpa [#allocation5], 0
    %12 = vsyncpa [#allocation6], 0
    %13 = vsyncpa [#allocation10], 0
    %14 = vsyncpa [#allocation4], 0
    // Predicated region
    $region2: #{tpu_custom_call.1} parent=1 // pred_check
      _
    $region3: #{tpu_custom_call.1} parent=1 // pred_check_branch
      %16 = sbr.rel (0) target = $region5
    $region4: #{tpu_custom_call.1} parent=1 // pred_region
      %18 = vsyncadd [#allocation3], 0
      %s20 = sshll.u32 %s0, 4
      %s21 = int_to_ptr.hbm [resolvable:$true] %s20
      %s22 = sshll.u32 [#allocation2], 4
      %s23 = int_to_ptr.vmem [resolvable:$true] %s22
      %25 = dma.hbm_to_vmem [thread:$0]  %s21, 16, %s23, [#allocation3]
    $region5: #{tpu_custom_call.1} parent=1 // pred_fallthru
      _
    // Predicated region
    $region6: #{tpu_custom_call.1} parent=1 // pred_check
      _
    $region7: #{tpu_custom_call.1} parent=1 // pred_check_branch
      %27 = sbr.rel (0) target = $region9
    $region8: #{tpu_custom_call.1} parent=1 // pred_region
      %29 = vsyncadd [#allocation5], 0
      %s31 = sshll.u32 %s1, 4
      %s32 = int_to_ptr.hbm [resolvable:$true] %s31
      %34 = dma.hbm_to_smem %s32, 16, [#allocation7], [#allocation5]
    $region9: #{tpu_custom_call.1} parent=1 // pred_fallthru
      _
    // Predicated region
    $region10: #{tpu_custom_call.1} parent=1 // pred_check
      _
    $region11: #{tpu_custom_call.1} parent=1 // pred_check_branch
      %36 = sbr.rel (0) target = $region13
    $region12: #{tpu_custom_call.1} parent=1 // pred_region
      %38 = vsyncadd [#allocation6], 0
      %s40 = sshll.u32 %s2, 4
      %s41 = int_to_ptr.vmem [resolvable:$true] %s40
      %43 = dma.vmem_to_smem %s41, 16, [#allocation8], [#allocation6]
    $region13: #{tpu_custom_call.1} parent=1 // pred_fallthru
      _
    // Predicated region
    $region14: #{tpu_custom_call.1} parent=1 // pred_check
      _
    $region15: #{tpu_custom_call.1} parent=1 // pred_check_branch
      %45 = sbr.rel (0) target = $region17
    $region16: #{tpu_custom_call.1} parent=1 // pred_region
      %47 = vsyncadd [#allocation10], 0
      %s49 = sshll.u32 %s3, 4
      %s50 = int_to_ptr.vmem [resolvable:$true] %s49
      %52 = dma.vmem_to_smem %s50, 16, [#allocation9], [#allocation10]
    $region17: #{tpu_custom_call.1} parent=1 // pred_fallthru
      _
    // Predicated region
    $region18: #{tpu_custom_call.1} parent=1 // pred_check
      _
    $region19: #{tpu_custom_call.1} parent=1 // pred_check_branch
      %54 = sbr.rel (0) target = $region21
    $region20: #{tpu_custom_call.1} parent=1 // pred_region
      %56 = vsyncadd [#allocation10], 0
      %s58 = sshll.u32 %s4, 4
      %s59 = int_to_ptr.vmem [resolvable:$true] %s58
      %61 = dma.vmem_to_smem %s59, 16, [#allocation11], [#allocation10]
    $region21: #{tpu_custom_call.1} parent=1 // pred_fallthru
      _
    // Predicated region
    $region22: #{tpu_custom_call.1} parent=1 // pred_check
      _
    $region23: #{tpu_custom_call.1} parent=1 // pred_check_branch
      %63 = sbr.rel (0) target = $region25
    $region24: #{tpu_custom_call.1} parent=1 // pred_region
      %65 = dma.done [#allocation3], 16
    $region25: #{tpu_custom_call.1} parent=1 // pred_fallthru
      _
    // Predicated region
    $region26: #{tpu_custom_call.1} parent=1 // pred_check
      _
    $region27: #{tpu_custom_call.1} parent=1 // pred_check_branch
      %67 = sbr.rel (0) target = $region29
    $region28: #{tpu_custom_call.1} parent=1 // pred_region
      %69 = dma.done [#allocation5], 16
    $region29: #{tpu_custom_call.1} parent=1 // pred_fallthru
      _
    // Predicated region
    $region30: #{tpu_custom_call.1} parent=1 // pred_check
      _
    $region31: #{tpu_custom_call.1} parent=1 // pred_check_branch
      %71 = sbr.rel (0) target = $region33
    $region32: #{tpu_custom_call.1} parent=1 // pred_region
      %73 = dma.done [#allocation6], 16
    $region33: #{tpu_custom_call.1} parent=1 // pred_fallthru
      _
    // Predicated region
    $region34: #{tpu_custom_call.1} parent=1 // pred_check
      _
    $region35: #{tpu_custom_call.1} parent=1 // pred_check_branch
      %75 = sbr.rel (0) target = $region37
    $region36: #{tpu_custom_call.1} parent=1 // pred_region
      %77 = dma.done [#allocation10], 16
    $region37: #{tpu_custom_call.1} parent=1 // pred_fallthru
      _
    // Predicated region
    $region38: #{tpu_custom_call.1} parent=1 // pred_check
      _
    $region39: #{tpu_custom_call.1} parent=1 // pred_check_branch
      %79 = sbr.rel (0) target = $region41
    $region40: #{tpu_custom_call.1} parent=1 // pred_region
      %81 = dma.done [#allocation10], 16
    $region41: #{tpu_custom_call.1} parent=1 // pred_fallthru
      _
    %82 = sfence
    %v83 = vld [vmem:[#allocation2] sm:$0x1]
    %s84 = sld [smem:[#allocation7]]
    %v85 = vstv %s84
    %v86 = vmul.f32 %v83, %v85
    %s87 = sld [smem:[#allocation8]]
    %v88 = vstv %s87
    %v89 = vadd.f32 %v86, %v88
    %v90 = vmax.f32 %v89, 0.0
    %s91 = sld [smem:[#allocation9]]
    %v92 = vstv %s91
    %v93 = vmul.f32 %v90, %v92
    %s94 = sld [smem:[#allocation9 + $0x1]]
    %v95 = vstv %s94
    %v96 = vmul.f32 %v90, %v95
    %s97 = sld [smem:[#allocation7 + $0x1]]
    %v98 = vstv %s97
    %v99 = vmul.f32 %v83, %v98
    %s100 = sld [smem:[#allocation8 + $0x1]]
    %v101 = vstv %s100
    %v102 = vadd.f32 %v99, %v101
    %v103 = vmax.f32 %v102, 0.0
    %s104 = sld [smem:[#allocation9 + $0x2]]
    %v105 = vstv %s104
    %v106 = vmul.f32 %v103, %v105
    %v107 = vadd.f32 %v93, %v106
    %s108 = sld [smem:[#allocation9 + $0x3]]
    %v109 = vstv %s108
    %v110 = vmul.f32 %v103, %v109
    %v111 = vadd.f32 %v96, %v110
    %s112 = sld [smem:[#allocation7 + $0x2]]
    %v113 = vstv %s112
    %v114 = vmul.f32 %v83, %v113
    %s115 = sld [smem:[#allocation8 + $0x2]]
    %v116 = vstv %s115
    %v117 = vadd.f32 %v114, %v116
    %v118 = vmax.f32 %v117, 0.0
    %s119 = sld [smem:[#allocation9 + $0x4]]
    %v120 = vstv %s119
    %v121 = vmul.f32 %v118, %v120
    %v122 = vadd.f32 %v107, %v121
    %s123 = sld [smem:[#allocation9 + $0x5]]
    %v124 = vstv %s123
    %v125 = vmul.f32 %v118, %v124
    %v126 = vadd.f32 %v111, %v125
    %s127 = sld [smem:[#allocation7 + $0x3]]
    %v128 = vstv %s127
    %v129 = vmul.f32 %v83, %v128
    %s130 = sld [smem:[#allocation8 + $0x3]]
    %v131 = vstv %s130
    %v132 = vadd.f32 %v129, %v131
    %v133 = vmax.f32 %v132, 0.0
    %s134 = sld [smem:[#allocation9 + $0x6]]
    %v135 = vstv %s134
    %v136 = vmul.f32 %v133, %v135
    %v137 = vadd.f32 %v122, %v136
    %s138 = sld [smem:[#allocation9 + $0x7]]
    %v139 = vstv %s138
    %v140 = vmul.f32 %v133, %v139
    %v141 = vadd.f32 %v126, %v140
    %s142 = sld [smem:[#allocation7 + $0x4]]
    %v143 = vstv %s142
    %v144 = vmul.f32 %v83, %v143
    %s145 = sld [smem:[#allocation8 + $0x4]]
    %v146 = vstv %s145
    %v147 = vadd.f32 %v144, %v146
    %v148 = vmax.f32 %v147, 0.0
    %s149 = sld [smem:[#allocation9 + $0x8]]
    %v150 = vstv %s149
    %v151 = vmul.f32 %v148, %v150
    %v152 = vadd.f32 %v137, %v151
    %s153 = sld [smem:[#allocation9 + $0x9]]
    %v154 = vstv %s153
    %v155 = vmul.f32 %v148, %v154
    %v156 = vadd.f32 %v141, %v155
    %s157 = sld [smem:[#allocation7 + $0x5]]
    %v158 = vstv %s157
    %v159 = vmul.f32 %v83, %v158
    %s160 = sld [smem:[#allocation8 + $0x5]]
    %v161 = vstv %s160
    %v162 = vadd.f32 %v159, %v161
    %v163 = vmax.f32 %v162, 0.0
    %s164 = sld [smem:[#allocation9 + $0xa]]
    %v165 = vstv %s164
    %v166 = vmul.f32 %v163, %v165
    %v167 = vadd.f32 %v152, %v166
    %s168 = sld [smem:[#allocation9 + $0xb]]
    %v169 = vstv %s168
    %v170 = vmul.f32 %v163, %v169
    %v171 = vadd.f32 %v156, %v170
    %s172 = sld [smem:[#allocation7 + $0x6]]
    %v173 = vstv %s172
    %v174 = vmul.f32 %v83, %v173
    %s175 = sld [smem:[#allocation8 + $0x6]]
    %v176 = vstv %s175
    %v177 = vadd.f32 %v174, %v176
    %v178 = vmax.f32 %v177, 0.0
    %s179 = sld [smem:[#allocation9 + $0xc]]
    %v180 = vstv %s179
    %v181 = vmul.f32 %v178, %v180
    %v182 = vadd.f32 %v167, %v181
    %s183 = sld [smem:[#allocation9 + $0xd]]
    %v184 = vstv %s183
    %v185 = vmul.f32 %v178, %v184
    %v186 = vadd.f32 %v171, %v185
    %s187 = sld [smem:[#allocation7 + $0x7]]
    %v188 = vstv %s187
    %v189 = vmul.f32 %v83, %v188
    %s190 = sld [smem:[#allocation8 + $0x7]]
    %v191 = vstv %s190
    %v192 = vadd.f32 %v189, %v191
    %v193 = vmax.f32 %v192, 0.0
    %s194 = sld [smem:[#allocation9 + $0xe]]
    %v195 = vstv %s194
    %v196 = vmul.f32 %v193, %v195
    %v197 = vadd.f32 %v182, %v196
    %s198 = sld [smem:[#allocation9 + $0xf]]
    %v199 = vstv %s198
    %v200 = vmul.f32 %v193, %v199
    %v201 = vadd.f32 %v186, %v200
    %s202 = sld [smem:[#allocation11]]
    %v203 = vstv %s202
    %v204 = vadd.f32 %v197, %v203
    %s205 = sld [smem:[#allocation11 + $0x1]]
    %v206 = vstv %s205
    %v207 = vadd.f32 %v201, %v206
    %v208 = vmax.f32 %v204, %v207
    %v209 = vsub.f32 %v204, %v208
    %v210 = vmul.f32 %v209, 1.442695
    %v211 = vpow.pop %v210
    %v212 = vsub.f32 %v207, %v208
    %v213 = vmul.f32 %v212, 1.442695
    %v214 = vpow.pop %v213
    %v215 = vadd.f32 %v211, %v214
    %v216 = vrcp.pop %v215
    %v217 = vmul.f32 %v215, %v216
    %v218 = vsub.f32 1.0, %v217
    %v219 = vmul.f32 %v216, %v218
    %v220 = vadd.f32 %v216, %v219
    %vm221 = vweird.f32 %v215
    %vm222 = vweird.f32 %v216
    %vm223 = vmor %vm221, %vm222
    %v224 = vsel %vm223, %v216, %v220
    %v225 = vand.u32 2147483647, %v215
    %vm226 = vcmp.eq.f32.partialorder %v225, 8.507059e+37
    %v227 = vand.u32 %v215, 2147483648
    %v228 = vor.u32 1.1754944e-38, %v227
    %v229 = vsel %vm226, %v228, %v224
    %v230 = vmul.f32 %v211, %v229
    %231 = vst [vmem:[#allocation12] sm:$0x1] %v230
    %v232 = vmul.f32 %v214, %v229
    %s233 = scalar_lea.vmem [#allocation12], 1
    %234 = vst [vmem:[%s233] sm:$0x1] %v232
    // Predicated region
    $region42: #{tpu_custom_call.1} parent=1 // pred_check
      _
    $region43: #{tpu_custom_call.1} parent=1 // pred_check_branch
      %236 = sbr.rel (0) target = $region45
    $region44: #{tpu_custom_call.1} parent=1 // pred_region
      %238 = vsyncadd [#allocation4], 0
      %s239 = sshll.u32 [#allocation12], 4
      %s240 = int_to_ptr.vmem [resolvable:$true] %s239
      %s241 = sshll.u32 %s5, 4
      %s242 = int_to_ptr.hbm [resolvable:$true] %s241
      %247 = dma.vmem_to_hbm [thread:$0]  %s240, 32, %s242, [#allocation4], 16, 16, 1
    $region45: #{tpu_custom_call.1} parent=1 // pred_fallthru
      _
    // Predicated region
    $region46: #{tpu_custom_call.1} parent=1 // pred_check
      _
    $region47: #{tpu_custom_call.1} parent=1 // pred_check_branch
      %249 = sbr.rel (0) target = $region49
    $region48: #{tpu_custom_call.1} parent=1 // pred_region
      %251 = dma.done [#allocation4], 32
    $region49: #{tpu_custom_call.1} parent=1 // pred_fallthru
      _
    %252 = vsyncpa [#allocation3], 1
    %253 = vsyncpa [#allocation4], 1
    %254 = vsyncpa [#allocation5], 1
    %255 = vsyncpa [#allocation6], 1
    %256 = vsyncpa [#allocation10], 1

</llo_original>
